<compile_context>
chip_gen: v7x
topology: tpu7x:2x2x1
jax: 0.10.0
libtpu: 0.0.40
codegen_flags: <defaults>
</compile_context>

<pallas_src>
import jax
import jax.numpy as jnp
from jax.experimental import pallas as pl
from jax.experimental.pallas import tpu as pltpu  # noqa: F401  (TPU backend)

# ----------------------------- configuration --------------------------------
B = 2                      # batch of images
C = 3                      # RGB
H = W = 16                 # synthetic "preprocessed" image size
PATCH = 4
P = (H // PATCH) * (W // PATCH)        # 16 patches per image
PD = C * PATCH * PATCH                 # 48 raw patch features
PD_PAD = 128                           # padded to a full lane width
D = 128                                # hidden size
NQ = 8                                 # Q-Former query tokens ("generated" tokens)
V = 128                                # synthetic vocab size (lane dense)
assert V == D                          # vocab projection folded into the V weight

# Synthetic token vocabulary (only a handful of real words; the rest decode to
# the empty string and get filtered by the post-processing, like the module).
VOCAB_WORDS = ["Cat", " dog ", "", "Car", "tree", "Person", "   ", "boat",
               "Bird", "house"] + [""] * (V - 10)


# ------------------------------ Pallas kernel --------------------------------
def fused_vqa_kernel(patch_ref, w_ref, bias_ref, tok_ref):
    """One fused step for the whole batch.

    patch_ref: (B*P, PD_PAD) bf16 raw unfolded patches (normalization folded
               into w_ref / bias_ref).
    w_ref:     (PD_PAD, 2*D) bf16 fused weight  [score-proj | value->vocab].
    bias_ref:  (1, 2*D) f32 fused bias.
    tok_ref:   (B*NQ, 1) int32 argmax token ids.
    """
    # Single 256-wide MXU matmul over all images:
    #   cols [0:NQ)  -> scoresT (already scaled by 1/sqrt(D))
    #   cols [D:2D)  -> value path already projected to vocab-logit space
    kv = jnp.dot(patch_ref[...], w_ref[...],
                 preferred_element_type=jnp.float32) + bias_ref[...]
    scores_t = kv[:, :NQ]              # (B*P, NQ)
    vproj = kv[:, D:]                  # (B*P, V)

    col_idx = jax.lax.broadcasted_iota(jnp.int32, (NQ, V), 1)   # hoisted

    for b in range(B):                 # static unroll; slices are sublane-aligned
        s = scores_t[b * P:(b + 1) * P, :]      # (P, NQ)
        vb = vproj[b * P:(b + 1) * P, :]        # (P, V)

        # Softmax over the patch axis (sublanes), f32 throughout.
        m = jnp.max(s, axis=0, keepdims=True)
        e = jnp.exp(s - m)
        denom = jnp.sum(e, axis=0, keepdims=True)
        probs = e * pl.reciprocal(denom, approx=True)           # (P, NQ)

        # logits = probsT @ vproj_b  (vocab projection already folded in).
        logits = jax.lax.dot_general(probs, vb, (((0,), (0,)), ((), ())),
                                     preferred_element_type=jnp.float32)  # (NQ, V)

        # In-kernel argmax over the lane (vocab) axis; first-max tie-break.
        mx = jnp.max(logits, axis=-1, keepdims=True)
        tok = jnp.min(jnp.where(logits >= mx, col_idx, V),
                      axis=-1, keepdims=True)                   # (NQ, 1) int32
        tok_ref[b * NQ:(b + 1) * NQ, :] = tok


# --------------------------- offline weight folding --------------------------
def _build_folded_params():
    key = jax.random.PRNGKey(0)
    ks = jax.random.split(key, 8)
    s = 0.02
    w_emb = s * jax.random.normal(ks[0], (PD_PAD, D), jnp.float32)
    q_tok = s * jax.random.normal(ks[1], (NQ, D), jnp.float32)
    w_q = s * jax.random.normal(ks[2], (D, D), jnp.float32)
    w_k = s * jax.random.normal(ks[3], (D, D), jnp.float32)
    w_v = s * jax.random.normal(ks[4], (D, D), jnp.float32)
    w_vocab = s * jax.random.normal(ks[5], (D, V), jnp.float32)

    # CLIP-style per-channel preprocessing constants.
    mean = jnp.array([0.48145466, 0.4578275, 0.40821073], jnp.float32)
    std = jnp.array([0.26862954, 0.26130258, 0.27577711], jnp.float32)
    inv_std = 1.0 / std

    # Fold (x - mean) * inv_std into the patch embedding (unfold order is
    # channel-major within a patch, i.e. torch-unfold order).
    ch = jnp.repeat(jnp.arange(C), PATCH * PATCH)          # (PD,) col -> channel
    scale_vec = inv_std[ch]                                # (PD,)
    shift_vec = (mean * inv_std)[ch]                       # (PD,)
    w_emb_real = w_emb[:PD]                                # padded rows were dead
    w_emb_eff = scale_vec[:, None] * w_emb_real            # (PD, D)
    bias_feat = -(shift_vec @ w_emb_real)                  # (D,)

    # Image-independent query projection, pre-scaled by 1/sqrt(D).
    q_scaled = (q_tok @ w_q) * (1.0 / jnp.sqrt(jnp.float32(D)))   # (NQ, D)

    # Fold patch embedding into K/V, fold K into the query side, and fold the
    # (linear) vocab projection through the attention value path.
    w_ek = w_emb_eff @ w_k                                 # (PD, D)
    b_k = bias_feat @ w_k                                  # (D,)
    w_ev = w_emb_eff @ w_v                                 # (PD, D)
    b_v = bias_feat @ w_v                                  # (D,)

    w_score = w_ek @ q_scaled.T                            # (PD, NQ)
    b_score = q_scaled @ b_k                               # (NQ,)
    w_evv = w_ev @ w_vocab                                 # (PD, V)
    b_vv = b_v @ w_vocab                                   # (V,)

    w_cat = jnp.zeros((PD_PAD, 2 * D), jnp.float32)
    w_cat = w_cat.at[:PD, :NQ].set(w_score)
    w_cat = w_cat.at[:PD, D:].set(w_evv)
    bias_cat = jnp.zeros((1, 2 * D), jnp.float32)
    bias_cat = bias_cat.at[0, :NQ].set(b_score)
    bias_cat = bias_cat.at[0, D:].set(b_vv)
    return w_cat.astype(jnp.bfloat16), bias_cat            # bf16 MXU operands


# ------------------------------ device program -------------------------------
def _tokens_impl(images_nchw, w_cat, bias_cat):
    """[B, C, H, W] raw images -> [B, NQ] int32 token ids (one device program)."""
    # Unfold to patches (torch-unfold order) and zero-pad features to 128 lanes.
    # Normalization is already folded into w_cat / bias_cat.
    x = images_nchw.reshape(B, C, H // PATCH, PATCH, W // PATCH, PATCH)
    x = jnp.transpose(x, (0, 2, 4, 1, 3, 5)).reshape(B * P, PD)
    patches = jnp.pad(x, ((0, 0), (0, PD_PAD - PD))).astype(jnp.bfloat16)

    toks = pl.pallas_call(
        fused_vqa_kernel,
        out_shape=jax.ShapeDtypeStruct((B * NQ, 1), jnp.int32),
    )(patches, w_cat, bias_cat)
    return toks.reshape(B, NQ)


class BLIP2VQAVocabularyPallas:
    """Synthetic BLIP2VQAVocabulary: one fused Pallas kernel for the numeric core."""

    def __init__(self, question="Question: what's in the image? Answer:"):
        self._question = question  # kept for API parity; not used numerically
        self.w_cat, self.bias_cat = _build_folded_params()
        # jit fuses the patch unfold with the pallas_call -> single dispatch.
        self._token_fn = jax.jit(_tokens_impl)

    def forward(self, images_nchw):
        # TODO(synk): original forward takes image file paths + PIL loading and
        # runs BLIP-2 T5 autoregressive generation; here image arrays are taken
        # directly and "generation" is a single in-kernel argmax per query token.
        token_ids = jax.block_until_ready(
            self._token_fn(images_nchw, self.w_cat, self.bias_cat))
        token_ids = jax.device_get(token_ids)                  # (B, NQ) int32

        vocabularies = []
        for b in range(B):
            caption = ",".join(VOCAB_WORDS[int(t)] for t in token_ids[b])
            # Exact string post-processing of the reference forward():
            vocabulary = list(set(caption.split(",")))
            vocabulary = [v.strip().lower() for v in vocabulary]
            vocabulary = [v for v in vocabulary if v]
            vocabulary = ["object"] if not vocabulary else vocabulary
            vocabularies.append(vocabulary)
        return vocabularies

    __call__ = forward


if __name__ == "__main__":
    key = jax.random.PRNGKey(0)
    images = jax.random.uniform(key, (B, C, H, W), jnp.float32)  # NCHW in [0,1)
    model = BLIP2VQAVocabularyPallas()
    vocabularies = model(images)
    assert isinstance(vocabularies, list) and len(vocabularies) == B
    assert all(isinstance(v, list) and len(v) >= 1 for v in vocabularies)
    assert all(isinstance(w, str) and w for v in vocabularies for w in v)
    print("KERNEL_OK")
</pallas_src>

<mosaic_0001>
module attributes {stable_mosaic.version = 11 : i64} {
  func.func @fused_vqa_kernel(%arg0: memref<32x128xbf16, #tpu.memory_space<vmem>>, %arg1: memref<128x256xbf16, #tpu.memory_space<vmem>>, %arg2: memref<1x256xf32, #tpu.memory_space<vmem>>, %arg3: memref<16x1xi32, #tpu.memory_space<vmem>>) attributes {dimension_semantics = [], scalar_prefetch = 0 : i64, scratch_operands = 0 : i64, tpu.core_type = #tpu.core_type<tc>} {
    %c0 = arith.constant 0 : index
    %c0_0 = arith.constant 0 : index
    %0 = vector.load %arg0[%c0, %c0_0] : memref<32x128xbf16, #tpu.memory_space<vmem>>, vector<32x128xbf16>
    %c0_1 = arith.constant 0 : index
    %c0_2 = arith.constant 0 : index
    %1 = vector.load %arg1[%c0_1, %c0_2] : memref<128x256xbf16, #tpu.memory_space<vmem>>, vector<128x256xbf16>
    %cst = arith.constant dense<0.000000e+00> : vector<32x256xf32>
    %2 = tpu.matmul %0, %1, %cst {dimension_numbers = #tpu.dot_dimension_numbers<[1], [0], [0], [1], [0, 0, 1, 1], [], []>} : vector<32x128xbf16>, vector<128x256xbf16>, vector<32x256xf32> -> vector<32x256xf32>
    %c0_3 = arith.constant 0 : index
    %c0_4 = arith.constant 0 : index
    %3 = vector.load %arg2[%c0_3, %c0_4] : memref<1x256xf32, #tpu.memory_space<vmem>>, vector<1x256xf32>
    %4 = vector.broadcast %3 : vector<1x256xf32> to vector<32x256xf32>
    %5 = arith.addf %2, %4 : vector<32x256xf32>
    %6 = vector.extract_strided_slice %5 {offsets = [0, 0], sizes = [32, 8], strides = [1, 1]} : vector<32x256xf32> to vector<32x8xf32>
    %7 = vector.extract_strided_slice %5 {offsets = [0, 128], sizes = [32, 128], strides = [1, 1]} : vector<32x256xf32> to vector<32x128xf32>
    %8 = tpu.iota {dimensions = array<i32: 1>} : vector<8x128xi32>
    %9 = vector.extract_strided_slice %6 {offsets = [0, 0], sizes = [16, 8], strides = [1, 1]} : vector<32x8xf32> to vector<16x8xf32>
    %10 = vector.extract_strided_slice %7 {offsets = [0, 0], sizes = [16, 128], strides = [1, 1]} : vector<32x128xf32> to vector<16x128xf32>
    %cst_5 = arith.constant dense<0xFF800000> : vector<8xf32>
    %11 = vector.multi_reduction <maximumf>, %9, %cst_5 [0] : vector<16x8xf32> to vector<8xf32>
    %12 = vector.shape_cast %11 : vector<8xf32> to vector<1x8xf32>
    %13 = vector.broadcast %12 : vector<1x8xf32> to vector<16x8xf32>
    %14 = arith.subf %9, %13 : vector<16x8xf32>
    %15 = math.exp %14 : vector<16x8xf32>
    %cst_6 = arith.constant dense<0.000000e+00> : vector<8xf32>
    %16 = vector.multi_reduction <add>, %15, %cst_6 [0] : vector<16x8xf32> to vector<8xf32>
    %17 = vector.shape_cast %16 : vector<8xf32> to vector<1x8xf32>
    %18 = tpu.reciprocal %17 {approx = true} : vector<1x8xf32> -> vector<1x8xf32>
    %19 = vector.broadcast %18 : vector<1x8xf32> to vector<16x8xf32>
    %20 = arith.mulf %15, %19 : vector<16x8xf32>
    %cst_7 = arith.constant dense<0.000000e+00> : vector<8x128xf32>
    %21 = tpu.matmul %20, %10, %cst_7 {dimension_numbers = #tpu.dot_dimension_numbers<[0], [0], [1], [1], [0, 1, 1, 1], [], []>} : vector<16x8xf32>, vector<16x128xf32>, vector<8x128xf32> -> vector<8x128xf32>
    %cst_8 = arith.constant dense<0xFF800000> : vector<8xf32>
    %22 = vector.multi_reduction <maximumf>, %21, %cst_8 [1] : vector<8x128xf32> to vector<8xf32>
    %23 = vector.shape_cast %22 : vector<8xf32> to vector<8x1xf32>
    %24 = vector.broadcast %23 : vector<8x1xf32> to vector<8x128xf32>
    %25 = arith.cmpf oge, %21, %24 : vector<8x128xf32>
    %c128_i32 = arith.constant 128 : i32
    %26 = vector.broadcast %c128_i32 : i32 to vector<8x128xi32>
    %27 = arith.select %25, %8, %26 : vector<8x128xi1>, vector<8x128xi32>
    %cst_9 = arith.constant dense<2147483647> : vector<8xi32>
    %28 = vector.multi_reduction <minsi>, %27, %cst_9 [1] : vector<8x128xi32> to vector<8xi32>
    %29 = vector.shape_cast %28 : vector<8xi32> to vector<8x1xi32>
    %c0_10 = arith.constant 0 : index
    %c0_11 = arith.constant 0 : index
    %30 = vector.load %arg3[%c0_10, %c0_11] : memref<16x1xi32, #tpu.memory_space<vmem>>, vector<8x1xi32>
    tpu.vector_store %arg3[%c0_10, %c0_11], %29 {strides = array<i32>} : memref<16x1xi32, #tpu.memory_space<vmem>>, vector<8x1xi32>,
    %31 = vector.extract_strided_slice %6 {offsets = [16, 0], sizes = [16, 8], strides = [1, 1]} : vector<32x8xf32> to vector<16x8xf32>
    %32 = vector.extract_strided_slice %7 {offsets = [16, 0], sizes = [16, 128], strides = [1, 1]} : vector<32x128xf32> to vector<16x128xf32>
    %cst_12 = arith.constant dense<0xFF800000> : vector<8xf32>
    %33 = vector.multi_reduction <maximumf>, %31, %cst_12 [0] : vector<16x8xf32> to vector<8xf32>
    %34 = vector.shape_cast %33 : vector<8xf32> to vector<1x8xf32>
    %35 = vector.broadcast %34 : vector<1x8xf32> to vector<16x8xf32>
    %36 = arith.subf %31, %35 : vector<16x8xf32>
    %37 = math.exp %36 : vector<16x8xf32>
    %cst_13 = arith.constant dense<0.000000e+00> : vector<8xf32>
    %38 = vector.multi_reduction <add>, %37, %cst_13 [0] : vector<16x8xf32> to vector<8xf32>
    %39 = vector.shape_cast %38 : vector<8xf32> to vector<1x8xf32>
    %40 = tpu.reciprocal %39 {approx = true} : vector<1x8xf32> -> vector<1x8xf32>
    %41 = vector.broadcast %40 : vector<1x8xf32> to vector<16x8xf32>
    %42 = arith.mulf %37, %41 : vector<16x8xf32>
    %cst_14 = arith.constant dense<0.000000e+00> : vector<8x128xf32>
    %43 = tpu.matmul %42, %32, %cst_14 {dimension_numbers = #tpu.dot_dimension_numbers<[0], [0], [1], [1], [0, 1, 1, 1], [], []>} : vector<16x8xf32>, vector<16x128xf32>, vector<8x128xf32> -> vector<8x128xf32>
    %cst_15 = arith.constant dense<0xFF800000> : vector<8xf32>
    %44 = vector.multi_reduction <maximumf>, %43, %cst_15 [1] : vector<8x128xf32> to vector<8xf32>
    %45 = vector.shape_cast %44 : vector<8xf32> to vector<8x1xf32>
    %46 = vector.broadcast %45 : vector<8x1xf32> to vector<8x128xf32>
    %47 = arith.cmpf oge, %43, %46 : vector<8x128xf32>
    %c128_i32_16 = arith.constant 128 : i32
    %48 = vector.broadcast %c128_i32_16 : i32 to vector<8x128xi32>
    %49 = arith.select %47, %8, %48 : vector<8x128xi1>, vector<8x128xi32>
    %cst_17 = arith.constant dense<2147483647> : vector<8xi32>
    %50 = vector.multi_reduction <minsi>, %49, %cst_17 [1] : vector<8x128xi32> to vector<8xi32>
    %51 = vector.shape_cast %50 : vector<8xi32> to vector<8x1xi32>
    %c8 = arith.constant 8 : index
    %c0_18 = arith.constant 0 : index
    %52 = vector.load %arg3[%c8, %c0_18] : memref<16x1xi32, #tpu.memory_space<vmem>>, vector<8x1xi32>
    tpu.vector_store %arg3[%c8, %c0_18], %51 {strides = array<i32>} : memref<16x1xi32, #tpu.memory_space<vmem>>, vector<8x1xi32>,
    return
  }
}

</mosaic_0001>

<llo_original>
// kernel: _tokens_impl.1
$region0: #{_tokens_impl.1}
  #allocation0 [shape = 'u32[]', space=smem, size = 0x4, offset = 0x4, fixed_abs, tag = 'smem constant byte address 0x4 - core index']
  #allocation1 [shape = 'u32[144,128]{1,0:T(1,128)}', space=vmem, size = 0x12000, scoped, tag = 'internal scratch']
  %s0 = inlined_call_operand.vmem [shape: bf16[32,128], index: 0, kind: input, shape index: {}]
  %s1 = inlined_call_operand.vmem [shape: bf16[128,256], index: 1, kind: input, shape index: {}]
  %s2 = inlined_call_operand.vmem [shape: f32[1,256], index: 2, kind: input, shape index: {}]
  %s3 = inlined_call_operand.vmem [shape: s32[16,1], index: 3, kind: output, shape index: {}]
  %s4 = sld [smem:[#allocation0]]
  $region22: #{_tokens_impl.1} parent=0
    _
  %s6 = ssub.s32 1, %s4
  %s7 = scalar_select 0, %s6, %s4
  // Predicated region
  $region2: #{_tokens_impl.1} parent=0 // pred_check
    _
  $region3: #{_tokens_impl.1} parent=0 // pred_check_branch
    %9 = sbr.rel (0) target = $region5
  $region4: #{_tokens_impl.1} parent=0 // pred_region
    _
  $region5: #{_tokens_impl.1} parent=0 // pred_fallthru
    _
  // Predicated region
  $region6: #{_tokens_impl.1} parent=0 // pred_check
    _
  $region7: #{_tokens_impl.1} parent=0 // pred_check_branch
    %11 = sbr.rel (0) target = $region9
  $region8: #{_tokens_impl.1} parent=0 // pred_region
    _
  $region9: #{_tokens_impl.1} parent=0 // pred_fallthru
    _
  // Predicated region
  $region10: #{_tokens_impl.1} parent=0 // pred_check
    _
  $region11: #{_tokens_impl.1} parent=0 // pred_check_branch
    %13 = sbr.rel (0) target = $region13
  $region12: #{_tokens_impl.1} parent=0 // pred_region
    _
  $region13: #{_tokens_impl.1} parent=0 // pred_fallthru
    _
  %v15 = vld [vmem:[%s0] sm:$0xf]
  %v16 = vld [vmem:[%s0 + $0x4] sm:$0xf]
  %v17 = vld [vmem:[%s0 + $0x8] sm:$0xf]
  %v18 = vld [vmem:[%s0 + $0xc] sm:$0xf]
  %v19 = vld [vmem:[%s1] sm:$0xff]
  %v20 = vld [vmem:[%s1 + $0x8] sm:$0xff]
  %v21 = vld [vmem:[%s1 + $0x10] sm:$0xff]
  %v22 = vld [vmem:[%s1 + $0x18] sm:$0xff]
  %v23 = vld [vmem:[%s1 + $0x20] sm:$0xff]
  %v24 = vld [vmem:[%s1 + $0x28] sm:$0xff]
  %v25 = vld [vmem:[%s1 + $0x30] sm:$0xff]
  %v26 = vld [vmem:[%s1 + $0x38] sm:$0xff]
  %v27 = vld [vmem:[%s1 + $0x40] sm:$0xff]
  %v28 = vld [vmem:[%s1 + $0x48] sm:$0xff]
  %v29 = vld [vmem:[%s1 + $0x50] sm:$0xff]
  %v30 = vld [vmem:[%s1 + $0x58] sm:$0xff]
  %v31 = vld [vmem:[%s1 + $0x60] sm:$0xff]
  %v32 = vld [vmem:[%s1 + $0x68] sm:$0xff]
  %v33 = vld [vmem:[%s1 + $0x70] sm:$0xff]
  %v34 = vld [vmem:[%s1 + $0x78] sm:$0xff]
  %v35 = vld [vmem:[%s2] sm:$0x3]
  %v37 = vlaneseq
  %v38 = vshrl.u32 %v37, 7
  %v39 = vsub.s32 0, %v38
  %v40 = vrot.slane %v35, %v39
  %v41 = vlaneseq
  %v42 = vshrl.u32 %v41, 7
  %v43 = vsub.s32 1, %v42
  %v44 = vrot.slane %v35, %v43
  %v51 = vunpack.c.l.b16 %v15
  %v52 = vunpack.c.l.b16 %v16
  %v53 = vunpack.c.l.b16 %v17
  %v54 = vunpack.c.l.b16 %v18
  %v55 = vpack.c.b16 %v52, %v51
  %v56 = vpack.c.b16 %v54, %v53
  %v75 = vunpack.c.l.b16 %v19
  %v76 = vunpack.c.h.b16 %v19
  %v77 = vunpack.c.l.b16 %v20
  %v78 = vunpack.c.h.b16 %v20
  %v79 = vunpack.c.l.b16 %v21
  %v80 = vunpack.c.h.b16 %v21
  %v81 = vunpack.c.l.b16 %v22
  %v82 = vunpack.c.h.b16 %v22
  %v83 = vunpack.c.l.b16 %v23
  %v84 = vunpack.c.h.b16 %v23
  %v85 = vunpack.c.l.b16 %v24
  %v86 = vunpack.c.h.b16 %v24
  %v87 = vunpack.c.l.b16 %v25
  %v88 = vunpack.c.h.b16 %v25
  %v89 = vunpack.c.l.b16 %v26
  %v90 = vunpack.c.h.b16 %v26
  %v91 = vunpack.c.l.b16 %v27
  %v92 = vunpack.c.h.b16 %v27
  %v93 = vunpack.c.l.b16 %v28
  %v94 = vunpack.c.h.b16 %v28
  %v95 = vunpack.c.l.b16 %v29
  %v96 = vunpack.c.h.b16 %v29
  %v97 = vunpack.c.l.b16 %v30
  %v98 = vunpack.c.h.b16 %v30
  %v99 = vunpack.c.l.b16 %v31
  %v100 = vunpack.c.h.b16 %v31
  %v101 = vunpack.c.l.b16 %v32
  %v102 = vunpack.c.h.b16 %v32
  %v103 = vunpack.c.l.b16 %v33
  %v104 = vunpack.c.h.b16 %v33
  %v105 = vunpack.c.l.b16 %v34
  %v106 = vunpack.c.h.b16 %v34
  %v107 = vpack.c.b16 %v77, %v75
  %v108 = vpack.c.b16 %v78, %v76
  %v109 = vpack.c.b16 %v81, %v79
  %v110 = vpack.c.b16 %v82, %v80
  %v111 = vpack.c.b16 %v85, %v83
  %v112 = vpack.c.b16 %v86, %v84
  %v113 = vpack.c.b16 %v89, %v87
  %v114 = vpack.c.b16 %v90, %v88
  %v115 = vpack.c.b16 %v93, %v91
  %v116 = vpack.c.b16 %v94, %v92
  %v117 = vpack.c.b16 %v97, %v95
  %v118 = vpack.c.b16 %v98, %v96
  %v119 = vpack.c.b16 %v101, %v99
  %v120 = vpack.c.b16 %v102, %v100
  %v121 = vpack.c.b16 %v105, %v103
  %v122 = vpack.c.b16 %v106, %v104
  %139 = vmatprep.subr.bf16.mxu0 %v108
  %140 = vmatpush1.bf16.msra.mxu0 %v107
  %141 = vmatprep.subr.bf16.mxu0 %v110
  %142 = vmatpush1.bf16.msra.mxu0 %v109
  %143 = vmatprep.subr.bf16.mxu0 %v112
  %144 = vmatpush1.bf16.msra.mxu0 %v111
  %145 = vmatprep.subr.bf16.mxu0 %v114
  %146 = vmatpush1.bf16.msra.mxu0 %v113
  %147 = vmatprep.subr.bf16.mxu0 %v116
  %148 = vmatpush1.bf16.msra.mxu0 %v115
  %149 = vmatprep.subr.bf16.mxu0 %v118
  %150 = vmatpush1.bf16.msra.mxu0 %v117
  %151 = vmatprep.subr.bf16.mxu0 %v120
  %152 = vmatpush1.bf16.msra.mxu0 %v119
  %153 = vmatprep.subr.bf16.mxu0 %v122
  %154 = vmatpush1.bf16.msra.mxu0 %v121
  %155 = vmatprep.subr.bf16.mxu0 0
  %156 = vmatpush1.bf16.msra.mxu0 0
  %157 = vmatprep.subr.bf16.mxu0 0
  %158 = vmatpush1.bf16.msra.mxu0 0
  %159 = vmatprep.subr.bf16.mxu0 0
  %160 = vmatpush1.bf16.msra.mxu0 0
  %161 = vmatprep.subr.bf16.mxu0 0
  %162 = vmatpush1.bf16.msra.mxu0 0
  %163 = vmatprep.subr.bf16.mxu0 0
  %164 = vmatpush1.bf16.msra.mxu0 0
  %165 = vmatprep.subr.bf16.mxu0 0
  %166 = vmatpush1.bf16.msra.mxu0 0
  %167 = vmatprep.subr.bf16.mxu0 0
  %168 = vmatpush1.bf16.msra.mxu0 0
  %169 = vmatprep.subr.bf16.mxu0 0
  %170 = vmatpush1.bf16.msra.mxu0 0
  %171 = vmatprep.mubr.bf16.mxu0 0
  %172 = vmatmul.mubr.bf16.gmra.mrb[0].mxu0 %v55
  %v173 = vpop.f32.mrb[0].mxu0
  %v174 = vadd.f32 %v40, %v173
  %v175 = vpop.f32.mrb[0].mxu0
  %v176 = vadd.f32 %v44, %v175
  %v177 = vpop.f32.mrb[0].mxu0
  %v178 = vadd.f32 %v40, %v177
  %v179 = vpop.f32.mrb[0].mxu0
  %v180 = vadd.f32 %v44, %v179
  %181 = vmatprep.mubr.bf16.mxu0 0
  %182 = vmatmul.mubr.bf16.gmra.mrb[0].mxu0 %v56
  %v183 = vpop.f32.mrb[0].mxu0
  %v184 = vadd.f32 %v40, %v183
  %v185 = vpop.f32.mrb[0].mxu0
  %v186 = vadd.f32 %v44, %v185
  %v187 = vpop.f32.mrb[0].mxu0
  %v188 = vadd.f32 %v40, %v187
  %v189 = vpop.f32.mrb[0].mxu0
  %v190 = vadd.f32 %v44, %v189
  %191 = vdwg.mxu0
  %v192 = vlaneseq
  %v193 = vand.u32 %v192, 127
  %vm194 = vcmask 64512
  %v195 = vsel %vm194, %v174, -inf
  %v196 = vsel %vm194, %v178, -inf
  %v197 = vmax.f32 %v195, %v196
  %v198 = vrot.slane %v197, 4
  %v199 = vmax.f32 %v197, %v198
  %v200 = vrot.slane %v199, 2
  %v201 = vmax.f32 %v199, %v200
  %v202 = vrot.slane %v201, 1
  %v203 = vmax.f32 %v201, %v202
  %v204 = vsub.f32 %v174, %v203
  %v205 = vsub.f32 %v178, %v203
  %v206 = vmul.f32 %v204, 1.442695
  %v207 = vpow.pop %v206
  %v208 = vmul.f32 %v205, 1.442695
  %v209 = vpow.pop %v208
  %v210 = vsel %vm194, %v207, 0.0
  %v211 = vsel %vm194, %v209, 0.0
  %v212 = vadd.f32 %v210, %v211
  %v213 = vrot.slane %v212, 4
  %v214 = vadd.f32 %v212, %v213
  %v215 = vrot.slane %v214, 2
  %v216 = vadd.f32 %v214, %v215
  %v217 = vrot.slane %v216, 1
  %v218 = vadd.f32 %v216, %v217
  %v219 = vrcp.pop %v218
  %v220 = vmul.f32 %v207, %v219
  %v221 = vmul.f32 %v209, %v219
  %222 = vxpose.xlu0.b32.start [1/16] %v220, 128
  %223 = vxpose.xlu0.b32.cont [2/16] %v221, 128
  %224 = vxpose.xlu0.b32.cont [3/16] 0.0, 128
  %225 = vxpose.xlu0.b32.cont [4/16] 0.0, 128
  %226 = vxpose.xlu0.b32.cont [5/16] 0.0, 128
  %227 = vxpose.xlu0.b32.cont [6/16] 0.0, 128
  %228 = vxpose.xlu0.b32.cont [7/16] 0.0, 128
  %229 = vxpose.xlu0.b32.cont [8/16] 0.0, 128
  %230 = vxpose.xlu0.b32.cont [9/16] 0.0, 128
  %231 = vxpose.xlu0.b32.cont [10/16] 0.0, 128
  %232 = vxpose.xlu0.b32.cont [11/16] 0.0, 128
  %233 = vxpose.xlu0.b32.cont [12/16] 0.0, 128
  %234 = vxpose.xlu0.b32.cont [13/16] 0.0, 128
  %235 = vxpose.xlu0.b32.cont [14/16] 0.0, 128
  %236 = vxpose.xlu0.b32.cont [15/16] 0.0, 128
  %237 = vxpose.xlu0.b32.end [16/16] 0.0, 128
  %v238 = vpop.trf.xlu0
  %v239 = vpop.trf.xlu0
  %v240 = vpop.trf.xlu0
  %v241 = vpop.trf.xlu0
  %v242 = vpop.trf.xlu0
  %v243 = vpop.trf.xlu0
  %v244 = vpop.trf.xlu0
  %v245 = vpop.trf.xlu0
  %v246 = vpop.trf.xlu0
  %v247 = vpop.trf.xlu0
  %v248 = vpop.trf.xlu0
  %v249 = vpop.trf.xlu0
  %v250 = vpop.trf.xlu0
  %v251 = vpop.trf.xlu0
  %v252 = vpop.trf.xlu0
  %v253 = vpop.trf.xlu0
  %vm254 = vcmask 130048
  %v256 = vsel %vm254, %v238, 0
  %258 = vmatprep.subr.mxu0 0.0
  %259 = vmatpush1.msra.mxu0 %v176
  %260 = vmatprep.subr.mxu0 0.0
  %261 = vmatpush1.msra.mxu0 %v180
  %262 = vmatprep.subr.mxu0 0.0
  %263 = vmatpush1.msra.mxu0 0.0
  %264 = vmatprep.subr.mxu0 0.0
  %265 = vmatpush1.msra.mxu0 0.0
  %266 = vmatprep.subr.mxu0 0.0
  %267 = vmatpush1.msra.mxu0 0.0
  %268 = vmatprep.subr.mxu0 0.0
  %269 = vmatpush1.msra.mxu0 0.0
  %270 = vmatprep.subr.mxu0 0.0
  %271 = vmatpush1.msra.mxu0 0.0
  %272 = vmatprep.subr.mxu0 0.0
  %273 = vmatpush1.msra.mxu0 0.0
  %274 = vmatprep.subr.mxu0 0.0
  %275 = vmatpush1.msra.mxu0 0.0
  %276 = vmatprep.subr.mxu0 0.0
  %277 = vmatpush1.msra.mxu0 0.0
  %278 = vmatprep.subr.mxu0 0.0
  %279 = vmatpush1.msra.mxu0 0.0
  %280 = vmatprep.subr.mxu0 0.0
  %281 = vmatpush1.msra.mxu0 0.0
  %282 = vmatprep.subr.mxu0 0.0
  %283 = vmatpush1.msra.mxu0 0.0
  %284 = vmatprep.subr.mxu0 0.0
  %285 = vmatpush1.msra.mxu0 0.0
  %286 = vmatprep.subr.mxu0 0.0
  %287 = vmatpush1.msra.mxu0 0.0
  %288 = vmatprep.subr.mxu0 0.0
  %289 = vmatpush1.msra.mxu0 0.0
  %290 = vmatprep.subr.mxu0 0.0
  %291 = vmatpush1.msra.mxu0 0.0
  %292 = vmatprep.subr.mxu0 0.0
  %293 = vmatpush1.msra.mxu0 0.0
  %294 = vmatprep.subr.mxu0 0.0
  %295 = vmatpush1.msra.mxu0 0.0
  %296 = vmatprep.subr.mxu0 0.0
  %297 = vmatpush1.msra.mxu0 0.0
  %298 = vmatprep.subr.mxu0 0.0
  %299 = vmatpush1.msra.mxu0 0.0
  %300 = vmatprep.subr.mxu0 0.0
  %301 = vmatpush1.msra.mxu0 0.0
  %302 = vmatprep.subr.mxu0 0.0
  %303 = vmatpush1.msra.mxu0 0.0
  %304 = vmatprep.subr.mxu0 0.0
  %305 = vmatpush1.msra.mxu0 0.0
  %306 = vmatprep.subr.mxu0 0.0
  %307 = vmatpush1.msra.mxu0 0.0
  %308 = vmatprep.subr.mxu0 0.0
  %309 = vmatpush1.msra.mxu0 0.0
  %310 = vmatprep.subr.mxu0 0.0
  %311 = vmatpush1.msra.mxu0 0.0
  %312 = vmatprep.subr.mxu0 0.0
  %313 = vmatpush1.msra.mxu0 0.0
  %314 = vmatprep.subr.mxu0 0.0
  %315 = vmatpush1.msra.mxu0 0.0
  %316 = vmatprep.subr.mxu0 0.0
  %317 = vmatpush1.msra.mxu0 0.0
  %318 = vmatprep.subr.mxu0 0.0
  %319 = vmatpush1.msra.mxu0 0.0
  %320 = vmatprep.subr.mxu0 0.0
  %321 = vmatpush1.msra.mxu0 0.0
  %322 = vmatprep.mubr.f32.mxu0 0.0
  %323 = vmatmul.mubr.f32.gmra.mrb[0].mxu0 %v256
  %v324 = vpop.f32.mrb[0].mxu0
  %v325 = vadd.f32 0.0, %v324
  %v326 = vpop.f32.mrb[0].mxu0
  %327 = vdwg.mxu0
  %328 = vmax.xlane.f32.xlu0 %v325
  %v329 = vpop.xlane.xlu0 %328
  %vm330 = vcmp.ge.f32.partialorder %v325, %v329
  %v331 = vsel %vm330, %v193, 128
  %v332 = vand.u32 %v331, 65535
  %v333 = vshra.s32 %v331, 16
  %v334 = vcvt.s32.f32 %v332
  %v335 = vcvt.s32.f32 %v333
  %336 = vmin.xlane.f32.xlu0 %v335
  %v337 = vpop.xlane.xlu0 %336
  %vm338 = vcmp.eq.f32.partialorder %v335, %v337
  %v339 = vsel %vm338, %v334, inf
  %340 = vmin.xlane.f32.xlu0 %v339
  %v341 = vpop.xlane.xlu0 %340
  %v342 = vcvt.f32.s32 %v341
  %v343 = vcvt.f32.s32 %v337
  %v344 = vshll.u32 %v343, 16
  %v345 = vadd.s32 %v344, %v342
  %vm346 = vcmask 7168
  %347 = vst.msk [vmem:[%s3] sm:$0xff] %vm346, %v345
  %v348 = vsel %vm194, %v184, -inf
  %v349 = vsel %vm194, %v188, -inf
  %v350 = vmax.f32 %v348, %v349
  %v351 = vrot.slane %v350, 4
  %v352 = vmax.f32 %v350, %v351
  %v353 = vrot.slane %v352, 2
  %v354 = vmax.f32 %v352, %v353
  %v355 = vrot.slane %v354, 1
  %v356 = vmax.f32 %v354, %v355
  %v357 = vsub.f32 %v184, %v356
  %v358 = vsub.f32 %v188, %v356
  %v359 = vmul.f32 %v357, 1.442695
  %v360 = vpow.pop %v359
  %v361 = vmul.f32 %v358, 1.442695
  %v362 = vpow.pop %v361
  %v363 = vsel %vm194, %v360, 0.0
  %v364 = vsel %vm194, %v362, 0.0
  %v365 = vadd.f32 %v363, %v364
  %v366 = vrot.slane %v365, 4
  %v367 = vadd.f32 %v365, %v366
  %v368 = vrot.slane %v367, 2
  %v369 = vadd.f32 %v367, %v368
  %v370 = vrot.slane %v369, 1
  %v371 = vadd.f32 %v369, %v370
  %v372 = vrcp.pop %v371
  %v373 = vmul.f32 %v360, %v372
  %v374 = vmul.f32 %v362, %v372
  %375 = vxpose.xlu0.b32.start [1/16] %v373, 128
  %376 = vxpose.xlu0.b32.cont [2/16] %v374, 128
  %377 = vxpose.xlu0.b32.cont [3/16] 0.0, 128
  %378 = vxpose.xlu0.b32.cont [4/16] 0.0, 128
  %379 = vxpose.xlu0.b32.cont [5/16] 0.0, 128
  %380 = vxpose.xlu0.b32.cont [6/16] 0.0, 128
  %381 = vxpose.xlu0.b32.cont [7/16] 0.0, 128
  %382 = vxpose.xlu0.b32.cont [8/16] 0.0, 128
  %383 = vxpose.xlu0.b32.cont [9/16] 0.0, 128
  %384 = vxpose.xlu0.b32.cont [10/16] 0.0, 128
  %385 = vxpose.xlu0.b32.cont [11/16] 0.0, 128
  %386 = vxpose.xlu0.b32.cont [12/16] 0.0, 128
  %387 = vxpose.xlu0.b32.cont [13/16] 0.0, 128
  %388 = vxpose.xlu0.b32.cont [14/16] 0.0, 128
  %389 = vxpose.xlu0.b32.cont [15/16] 0.0, 128
  %390 = vxpose.xlu0.b32.end [16/16] 0.0, 128
  %v391 = vpop.trf.xlu0
  %v392 = vpop.trf.xlu0
  %v393 = vpop.trf.xlu0
  %v394 = vpop.trf.xlu0
  %v395 = vpop.trf.xlu0
  %v396 = vpop.trf.xlu0
  %v397 = vpop.trf.xlu0
  %v398 = vpop.trf.xlu0
  %v399 = vpop.trf.xlu0
  %v400 = vpop.trf.xlu0
  %v401 = vpop.trf.xlu0
  %v402 = vpop.trf.xlu0
  %v403 = vpop.trf.xlu0
  %v404 = vpop.trf.xlu0
  %v405 = vpop.trf.xlu0
  %v406 = vpop.trf.xlu0
  %v408 = vsel %vm254, %v391, 0
  %410 = vmatprep.subr.mxu0 0.0
  %411 = vmatpush1.msra.mxu0 %v186
  %412 = vmatprep.subr.mxu0 0.0
  %413 = vmatpush1.msra.mxu0 %v190
  %414 = vmatprep.subr.mxu0 0.0
  %415 = vmatpush1.msra.mxu0 0.0
  %416 = vmatprep.subr.mxu0 0.0
  %417 = vmatpush1.msra.mxu0 0.0
  %418 = vmatprep.subr.mxu0 0.0
  %419 = vmatpush1.msra.mxu0 0.0
  %420 = vmatprep.subr.mxu0 0.0
  %421 = vmatpush1.msra.mxu0 0.0
  %422 = vmatprep.subr.mxu0 0.0
  %423 = vmatpush1.msra.mxu0 0.0
  %424 = vmatprep.subr.mxu0 0.0
  %425 = vmatpush1.msra.mxu0 0.0
  %426 = vmatprep.subr.mxu0 0.0
  %427 = vmatpush1.msra.mxu0 0.0
  %428 = vmatprep.subr.mxu0 0.0
  %429 = vmatpush1.msra.mxu0 0.0
  %430 = vmatprep.subr.mxu0 0.0
  %431 = vmatpush1.msra.mxu0 0.0
  %432 = vmatprep.subr.mxu0 0.0
  %433 = vmatpush1.msra.mxu0 0.0
  %434 = vmatprep.subr.mxu0 0.0
  %435 = vmatpush1.msra.mxu0 0.0
  %436 = vmatprep.subr.mxu0 0.0
  %437 = vmatpush1.msra.mxu0 0.0
  %438 = vmatprep.subr.mxu0 0.0
  %439 = vmatpush1.msra.mxu0 0.0
  %440 = vmatprep.subr.mxu0 0.0
  %441 = vmatpush1.msra.mxu0 0.0
  %442 = vmatprep.subr.mxu0 0.0
  %443 = vmatpush1.msra.mxu0 0.0
  %444 = vmatprep.subr.mxu0 0.0
  %445 = vmatpush1.msra.mxu0 0.0
  %446 = vmatprep.subr.mxu0 0.0
  %447 = vmatpush1.msra.mxu0 0.0
  %448 = vmatprep.subr.mxu0 0.0
  %449 = vmatpush1.msra.mxu0 0.0
  %450 = vmatprep.subr.mxu0 0.0
  %451 = vmatpush1.msra.mxu0 0.0
  %452 = vmatprep.subr.mxu0 0.0
  %453 = vmatpush1.msra.mxu0 0.0
  %454 = vmatprep.subr.mxu0 0.0
  %455 = vmatpush1.msra.mxu0 0.0
  %456 = vmatprep.subr.mxu0 0.0
  %457 = vmatpush1.msra.mxu0 0.0
  %458 = vmatprep.subr.mxu0 0.0
  %459 = vmatpush1.msra.mxu0 0.0
  %460 = vmatprep.subr.mxu0 0.0
  %461 = vmatpush1.msra.mxu0 0.0
  %462 = vmatprep.subr.mxu0 0.0
  %463 = vmatpush1.msra.mxu0 0.0
  %464 = vmatprep.subr.mxu0 0.0
  %465 = vmatpush1.msra.mxu0 0.0
  %466 = vmatprep.subr.mxu0 0.0
  %467 = vmatpush1.msra.mxu0 0.0
  %468 = vmatprep.subr.mxu0 0.0
  %469 = vmatpush1.msra.mxu0 0.0
  %470 = vmatprep.subr.mxu0 0.0
  %471 = vmatpush1.msra.mxu0 0.0
  %472 = vmatprep.subr.mxu0 0.0
  %473 = vmatpush1.msra.mxu0 0.0
  %474 = vmatprep.mubr.f32.mxu0 0.0
  %475 = vmatmul.mubr.f32.gmra.mrb[0].mxu0 %v408
  %v476 = vpop.f32.mrb[0].mxu0
  %v477 = vadd.f32 0.0, %v476
  %v478 = vpop.f32.mrb[0].mxu0
  %479 = vdwg.mxu0
  %480 = vmax.xlane.f32.xlu0 %v477
  %v481 = vpop.xlane.xlu0 %480
  %vm482 = vcmp.ge.f32.partialorder %v477, %v481
  %v483 = vsel %vm482, %v193, 128
  %v484 = vand.u32 %v483, 65535
  %v485 = vshra.s32 %v483, 16
  %v486 = vcvt.s32.f32 %v484
  %v487 = vcvt.s32.f32 %v485
  %488 = vmin.xlane.f32.xlu0 %v487
  %v489 = vpop.xlane.xlu0 %488
  %vm490 = vcmp.eq.f32.partialorder %v487, %v489
  %v491 = vsel %vm490, %v486, inf
  %492 = vmin.xlane.f32.xlu0 %v491
  %v493 = vpop.xlane.xlu0 %492
  %v494 = vcvt.f32.s32 %v493
  %v495 = vcvt.f32.s32 %v489
  %v496 = vshll.u32 %v495, 16
  %v497 = vadd.s32 %v496, %v494
  %498 = vst.msk [vmem:[%s3 + $0x8] sm:$0xff] %vm346, %v497
  // Predicated region
  $region14: #{_tokens_impl.1} parent=0 // pred_check
    _
  $region15: #{_tokens_impl.1} parent=0 // pred_check_branch
    %500 = sbr.rel (0) target = $region17
  $region16: #{_tokens_impl.1} parent=0 // pred_region
    _
  $region17: #{_tokens_impl.1} parent=0 // pred_fallthru
    _
  // Predicated region
  $region18: #{_tokens_impl.1} parent=0 // pred_check
    _
  $region19: #{_tokens_impl.1} parent=0 // pred_check_branch
    %502 = sbr.rel (0) target = $region21
  $region20: #{_tokens_impl.1} parent=0 // pred_region
    _
  $region21: #{_tokens_impl.1} parent=0 // pred_fallthru
    _

</llo_original>
